<compile_context>
chip_gen: v6e
topology: v6e:2x2x1
jax: 0.10.0
libtpu: 0.0.40
codegen_flags: <defaults>
</compile_context>

<pallas_src>
import jax
import jax.numpy as jnp
from jax.experimental import pallas as pl
from jax.experimental.pallas import tpu as pltpu


# --------------------------------------------------------------------------
# Parameter packing (done once at param-setup time, NOT per call).
# --------------------------------------------------------------------------
def _pad_rows_to8(a):
    r = (-a.shape[0]) % 8
    return jnp.pad(a, ((0, r), (0, 0))) if r else a


def pack_params(params):
    """Packs the 12 Encoder parameter tensors into one f32 slab.

    Layout: every block starts at an 8-row-aligned offset; slab lane width is
    h_dim.  net_f layer 3 is pre-folded into net_q layer 1 (W3@Q1, b3@Q1).
    Returns (slab, meta) where meta holds the static offsets/shapes.
    """
    (w1, b1, w2, b2, w3, b3, q1, qb1, q2, qb2, q3, qb3) = params
    d_in, h_dim = w1.shape
    out_dim = q3.shape[1]
    lanes = h_dim
    assert out_dim <= lanes and w3.shape[1] <= lanes

    # Exact linear fold of net_f layer 3 into net_q layer 1 (f32).
    w3q1 = jnp.dot(w3, q1, precision=jax.lax.Precision.HIGHEST)   # (h, h)
    b3q1 = jnp.dot(b3, q1, precision=jax.lax.Precision.HIGHEST)   # (1, h)

    def pad_cols(a):
        return jnp.pad(a, ((0, 0), (0, lanes - a.shape[1])))

    # One 8-row bias block: rows = [b1, b2, b3q1, qb1, qb2, qb3(padded)].
    bias_blk = jnp.concatenate([b1, b2, b3q1, qb1, qb2, pad_cols(qb3)], axis=0)

    blocks = [w1, w2, w3q1, q2, pad_cols(q3), bias_blk]
    offs, padded, rows = [], [], 0
    for blk in blocks:
        p = _pad_rows_to8(blk)
        offs.append(rows)
        padded.append(p)
        rows += p.shape[0]
    slab = jnp.concatenate(padded, axis=0).astype(jnp.float32)  # (rows, h_dim)

    meta = dict(d_in=d_in, h_dim=h_dim, out_dim=out_dim, lanes=lanes,
                offs=tuple(offs))
    return slab, meta


# --------------------------------------------------------------------------
# Kernel
# --------------------------------------------------------------------------
def _make_kernel(meta):
    d_in = meta["d_in"]
    h_dim = meta["h_dim"]
    o_w1, o_w2, o_w3q1, o_q2, o_q3, o_b = meta["offs"]

    def kernel(x_ref, slab_ref, out_ref):
        n = x_ref.shape[0]                                  # static
        x = x_ref[...]                                      # (n, d_in) f32

        # Static, 8-row-aligned slices of the parameter slab.
        w1 = slab_ref[o_w1:o_w1 + d_in, :]                  # (d_in, h)
        w2 = slab_ref[o_w2:o_w2 + h_dim, :]                 # (h, h)
        w3q1 = slab_ref[o_w3q1:o_w3q1 + h_dim, :]           # (h, h)
        q2 = slab_ref[o_q2:o_q2 + h_dim, :]                 # (h, h)
        q3 = slab_ref[o_q3:o_q3 + h_dim, :]                 # (h, lanes) padded
        biases = slab_ref[o_b:o_b + 8, :]                   # (8, lanes)
        b1, b2 = biases[0:1, :], biases[1:2, :]
        b3q1, qb1 = biases[2:3, :], biases[3:4, :]
        qb2, qb3 = biases[4:5, :], biases[5:6, :]

        # ---- net_f layers 1-2 over all N rows (float32) ---------------------
        h = jnp.tanh(jnp.dot(x, w1, preferred_element_type=jnp.float32) + b1)
        h = jnp.tanh(jnp.dot(h, w2, preferred_element_type=jnp.float32) + b2)

        # ---- row sum on VPU/XLU (keeps the MXU path free) -------------------
        h_sum = jnp.sum(h, axis=0, keepdims=True)           # (1, h)

        # ---- net_f layer 3 folded into net_q layer 1 ------------------------
        #   sum0(h@W3 + b3) @ Q1 + qb1 = h_sum @ (W3@Q1) + N*(b3@Q1) + qb1
        hq = jnp.tanh(jnp.dot(h_sum, w3q1, preferred_element_type=jnp.float32)
                      + float(n) * b3q1 + qb1)

        # ---- rest of net_q ---------------------------------------------------
        hq = jnp.tanh(jnp.dot(hq, q2, preferred_element_type=jnp.float32) + qb2)
        out_ref[...] = jnp.dot(hq, q3,
                               preferred_element_type=jnp.float32) + qb3

    return kernel


def encoder_forward(data_m, slab, meta):
    """Runs the Encoder forward pass. Returns a flat (2*z_dim,) f32 vector."""
    lanes = meta["lanes"]
    out_dim = meta["out_dim"]
    vmem_full = pl.BlockSpec(memory_space=pltpu.MemorySpace.VMEM)

    out = pl.pallas_call(
        _make_kernel(meta),
        out_shape=jax.ShapeDtypeStruct((1, lanes), jnp.float32),
        # No grid: 2 whole-array VMEM operands (data + packed param slab).
        in_specs=[vmem_full, vmem_full],
        out_specs=vmem_full,
    )(data_m.astype(jnp.float32), slab)

    return out[0, :out_dim]                                 # .flatten()


# --------------------------------------------------------------------------
# Synthetic parameters + pure-JAX reference (original, non-folded semantics)
# --------------------------------------------------------------------------
def make_params(key, s_dim, a_dim, z_dim, g_dim, h_dim=64):
    """Deterministic synthetic parameters (PyTorch-like uniform init).
    Linear weights stored transposed as (in_features, out_features)."""
    d_in = 2 * s_dim + a_dim
    shapes = [
        (d_in, h_dim), (1, h_dim),           # net_f linear 1
        (h_dim, h_dim), (1, h_dim),          # net_f linear 2
        (h_dim, g_dim), (1, g_dim),          # net_f linear 3
        (g_dim, h_dim), (1, h_dim),          # net_q linear 1
        (h_dim, h_dim), (1, h_dim),          # net_q linear 2
        (h_dim, 2 * z_dim), (1, 2 * z_dim),  # net_q linear 3
    ]
    keys = jax.random.split(key, len(shapes))
    params = []
    for k, shp in zip(keys, shapes):
        fan_in = shp[0] if shp[0] != 1 else shp[1]
        bound = 1.0 / jnp.sqrt(jnp.float32(fan_in))
        params.append(jax.random.uniform(k, shp, jnp.float32, -bound, bound))
    return tuple(params)


def encoder_reference(data_m, params):
    """Plain-JAX f32 reference with the original module structure
    (per-row net_f -> .sum(0) -> net_q -> flatten), highest dot precision."""
    (w1, b1, w2, b2, w3, b3, q1, qb1, q2, qb2, q3, qb3) = params
    hp = jax.lax.Precision.HIGHEST
    h = jnp.tanh(jnp.dot(data_m, w1, precision=hp) + b1)
    h = jnp.tanh(jnp.dot(h, w2, precision=hp) + b2)
    g = jnp.dot(h, w3, precision=hp) + b3
    gm = g.sum(0).reshape(1, -1)
    hq = jnp.tanh(jnp.dot(gm, q1, precision=hp) + qb1)
    hq = jnp.tanh(jnp.dot(hq, q2, precision=hp) + qb2)
    return (jnp.dot(hq, q3, precision=hp) + qb3).reshape(-1)


if __name__ == "__main__":
    # Small shapes consistent with the module.
    s_dim, a_dim, z_dim, g_dim = 6, 4, 5, 8
    n_rows = 64                      # data_m: (N, 2*s_dim + a_dim) = (64, 16)

    key = jax.random.PRNGKey(0)
    k_data, k_params = jax.random.split(key)
    data_m = jax.random.normal(k_data, (n_rows, 2 * s_dim + a_dim), jnp.float32)
    params = make_params(k_params, s_dim, a_dim, z_dim, g_dim)

    # Pack parameters once (param-setup time, not per call).
    slab, meta = pack_params(params)
    slab = jax.block_until_ready(slab)

    out = jax.block_until_ready(encoder_forward(data_m, slab, meta))
    ref = encoder_reference(data_m, params)

    assert out.shape == (2 * z_dim,)
    # Everything is f32 now; tolerance only covers the exact-in-real-arithmetic
    # reassociation of the layer-3 fold / row-sum and any internal MXU f32
    # pass decomposition.  Far tighter than the previous bf16 5e-2 bound.
    assert jnp.allclose(out, ref, atol=2e-2, rtol=2e-2), (out, ref)

    print("KERNEL_OK")
</pallas_src>

<mosaic_0001>
module attributes {stable_mosaic.version = 11 : i64} {
  func.func @kernel(%arg0: memref<64x16xf32, #tpu.memory_space<vmem>>, %arg1: memref<280x64xf32, #tpu.memory_space<vmem>>, %arg2: memref<1x64xf32, #tpu.memory_space<vmem>>) attributes {dimension_semantics = [], scalar_prefetch = 0 : i64, scratch_operands = 0 : i64, tpu.core_type = #tpu.core_type<tc>} {
    %c0 = arith.constant 0 : index
    %c0_0 = arith.constant 0 : index
    %0 = vector.load %arg0[%c0, %c0_0] : memref<64x16xf32, #tpu.memory_space<vmem>>, vector<64x16xf32>
    %c0_1 = arith.constant 0 : index
    %c0_2 = arith.constant 0 : index
    %1 = vector.load %arg1[%c0_1, %c0_2] : memref<280x64xf32, #tpu.memory_space<vmem>>, vector<16x64xf32>
    %c16 = arith.constant 16 : index
    %c0_3 = arith.constant 0 : index
    %2 = vector.load %arg1[%c16, %c0_3] : memref<280x64xf32, #tpu.memory_space<vmem>>, vector<64x64xf32>
    %c80 = arith.constant 80 : index
    %c0_4 = arith.constant 0 : index
    %3 = vector.load %arg1[%c80, %c0_4] : memref<280x64xf32, #tpu.memory_space<vmem>>, vector<64x64xf32>
    %c144 = arith.constant 144 : index
    %c0_5 = arith.constant 0 : index
    %4 = vector.load %arg1[%c144, %c0_5] : memref<280x64xf32, #tpu.memory_space<vmem>>, vector<64x64xf32>
    %c208 = arith.constant 208 : index
    %c0_6 = arith.constant 0 : index
    %5 = vector.load %arg1[%c208, %c0_6] : memref<280x64xf32, #tpu.memory_space<vmem>>, vector<64x64xf32>
    %c272 = arith.constant 272 : index
    %c0_7 = arith.constant 0 : index
    %6 = vector.load %arg1[%c272, %c0_7] : memref<280x64xf32, #tpu.memory_space<vmem>>, vector<8x64xf32>
    %7 = vector.extract_strided_slice %6 {offsets = [0, 0], sizes = [1, 64], strides = [1, 1]} : vector<8x64xf32> to vector<1x64xf32>
    %8 = vector.extract_strided_slice %6 {offsets = [1, 0], sizes = [1, 64], strides = [1, 1]} : vector<8x64xf32> to vector<1x64xf32>
    %9 = vector.extract_strided_slice %6 {offsets = [2, 0], sizes = [1, 64], strides = [1, 1]} : vector<8x64xf32> to vector<1x64xf32>
    %10 = vector.extract_strided_slice %6 {offsets = [3, 0], sizes = [1, 64], strides = [1, 1]} : vector<8x64xf32> to vector<1x64xf32>
    %11 = vector.extract_strided_slice %6 {offsets = [4, 0], sizes = [1, 64], strides = [1, 1]} : vector<8x64xf32> to vector<1x64xf32>
    %12 = vector.extract_strided_slice %6 {offsets = [5, 0], sizes = [1, 64], strides = [1, 1]} : vector<8x64xf32> to vector<1x64xf32>
    %cst = arith.constant dense<0.000000e+00> : vector<64x64xf32>
    %13 = tpu.matmul %0, %1, %cst {dimension_numbers = #tpu.dot_dimension_numbers<[1], [0], [0], [1], [0, 0, 1, 1], [], []>} : vector<64x16xf32>, vector<16x64xf32>, vector<64x64xf32> -> vector<64x64xf32>
    %14 = vector.broadcast %7 : vector<1x64xf32> to vector<64x64xf32>
    %15 = arith.addf %13, %14 : vector<64x64xf32>
    %16 = math.tanh %15 : vector<64x64xf32>
    %cst_8 = arith.constant dense<0.000000e+00> : vector<64x64xf32>
    %17 = tpu.matmul %16, %2, %cst_8 {dimension_numbers = #tpu.dot_dimension_numbers<[1], [0], [0], [1], [0, 0, 1, 1], [], []>} : vector<64x64xf32>, vector<64x64xf32>, vector<64x64xf32> -> vector<64x64xf32>
    %18 = vector.broadcast %8 : vector<1x64xf32> to vector<64x64xf32>
    %19 = arith.addf %17, %18 : vector<64x64xf32>
    %20 = math.tanh %19 : vector<64x64xf32>
    %cst_9 = arith.constant dense<0.000000e+00> : vector<64xf32>
    %21 = vector.multi_reduction <add>, %20, %cst_9 [0] : vector<64x64xf32> to vector<64xf32>
    %22 = vector.shape_cast %21 : vector<64xf32> to vector<1x64xf32>
    %cst_10 = arith.constant dense<0.000000e+00> : vector<1x64xf32>
    %23 = tpu.matmul %22, %3, %cst_10 {dimension_numbers = #tpu.dot_dimension_numbers<[1], [0], [0], [1], [0, 0, 1, 1], [], []>} : vector<1x64xf32>, vector<64x64xf32>, vector<1x64xf32> -> vector<1x64xf32>
    %cst_11 = arith.constant 6.400000e+01 : f32
    %24 = vector.broadcast %cst_11 : f32 to vector<1x64xf32>
    %25 = arith.mulf %24, %9 : vector<1x64xf32>
    %26 = arith.addf %23, %25 : vector<1x64xf32>
    %27 = arith.addf %26, %10 : vector<1x64xf32>
    %28 = math.tanh %27 : vector<1x64xf32>
    %cst_12 = arith.constant dense<0.000000e+00> : vector<1x64xf32>
    %29 = tpu.matmul %28, %4, %cst_12 {dimension_numbers = #tpu.dot_dimension_numbers<[1], [0], [0], [1], [0, 0, 1, 1], [], []>} : vector<1x64xf32>, vector<64x64xf32>, vector<1x64xf32> -> vector<1x64xf32>
    %30 = arith.addf %29, %11 : vector<1x64xf32>
    %31 = math.tanh %30 : vector<1x64xf32>
    %cst_13 = arith.constant dense<0.000000e+00> : vector<1x64xf32>
    %32 = tpu.matmul %31, %5, %cst_13 {dimension_numbers = #tpu.dot_dimension_numbers<[1], [0], [0], [1], [0, 0, 1, 1], [], []>} : vector<1x64xf32>, vector<64x64xf32>, vector<1x64xf32> -> vector<1x64xf32>
    %33 = arith.addf %32, %12 : vector<1x64xf32>
    %c0_14 = arith.constant 0 : index
    %c0_15 = arith.constant 0 : index
    %34 = vector.load %arg2[%c0_14, %c0_15] : memref<1x64xf32, #tpu.memory_space<vmem>>, vector<1x64xf32>
    tpu.vector_store %arg2[%c0_14, %c0_15], %33 {strides = array<i32>} : memref<1x64xf32, #tpu.memory_space<vmem>>, vector<1x64xf32>,
    return
  }
}

</mosaic_0001>

<llo_original>
// kernel: tpu_custom_call.1
$region0: #{tpu_custom_call.1}
  #allocation0 [shape = 'u32[]', space=smem, size = 0x4, offset = 0x4, fixed_abs, tag = 'smem constant byte address 0x4 - core index']
  #allocation1 [shape = 'u32[144,128]{1,0:T(1,128)}', space=vmem, size = 0x12000, scoped, tag = 'internal scratch']
  %s0 = inlined_call_operand.vmem [shape: f32[64,16], index: 0, kind: input, shape index: {}]
  %s1 = inlined_call_operand.vmem [shape: f32[280,64], index: 1, kind: input, shape index: {}]
  %s2 = inlined_call_operand.hbm [shape: f32[1,64], index: 2, kind: output, shape index: {}]
  %s3 = sld [smem:[#allocation0]]
  $region18: #{tpu_custom_call.1} parent=0
    _
  %s5 = ssub.s32 1, %s3
  %s6 = scalar_select 0, %s5, %s3
  $region1: #{tpu_custom_call.1} parent=0
    #allocation2 [shape = 'u8[512]{0}', space=vmem, size = 0x400, scoped, tag = 'output window, operand 0, single buffered']
    #allocation3 [shape = 's32[1]{0}', space=sflag, size = 0x4, scoped, tag = 'scoped memory for tpu_custom_call.1']
    %7 = vsyncpa [#allocation3], 0
    // Predicated region
    $region2: #{tpu_custom_call.1} parent=1 // pred_check
      _
    $region3: #{tpu_custom_call.1} parent=1 // pred_check_branch
      %9 = sbr.rel (0) target = $region5
    $region4: #{tpu_custom_call.1} parent=1 // pred_region
      _
    $region5: #{tpu_custom_call.1} parent=1 // pred_fallthru
      _
    // Predicated region
    $region6: #{tpu_custom_call.1} parent=1 // pred_check
      _
    $region7: #{tpu_custom_call.1} parent=1 // pred_check_branch
      %11 = sbr.rel (0) target = $region9
    $region8: #{tpu_custom_call.1} parent=1 // pred_region
      _
    $region9: #{tpu_custom_call.1} parent=1 // pred_fallthru
      _
    %v12 = vld [vmem:[%s0] sm:$0xff]
    %v13 = vld [vmem:[%s0 + $0x8] sm:$0xff]
    %v14 = vld [vmem:[%s0 + $0x10] sm:$0xff]
    %v15 = vld [vmem:[%s0 + $0x18] sm:$0xff]
    %v16 = vld [vmem:[%s0 + $0x20] sm:$0xff]
    %v17 = vld [vmem:[%s0 + $0x28] sm:$0xff]
    %v18 = vld [vmem:[%s0 + $0x30] sm:$0xff]
    %v19 = vld [vmem:[%s0 + $0x38] sm:$0xff]
    %v20 = vld [vmem:[%s1] sm:$0xff]
    %v21 = vld [vmem:[%s1 + $0x8] sm:$0xff]
    %v22 = vld [vmem:[%s1 + $0x10] sm:$0xff]
    %v23 = vld [vmem:[%s1 + $0x18] sm:$0xff]
    %v24 = vld [vmem:[%s1 + $0x20] sm:$0xff]
    %v25 = vld [vmem:[%s1 + $0x28] sm:$0xff]
    %v26 = vld [vmem:[%s1 + $0x30] sm:$0xff]
    %v27 = vld [vmem:[%s1 + $0x38] sm:$0xff]
    %v28 = vld [vmem:[%s1 + $0x40] sm:$0xff]
    %v29 = vld [vmem:[%s1 + $0x48] sm:$0xff]
    %v30 = vld [vmem:[%s1 + $0x50] sm:$0xff]
    %v31 = vld [vmem:[%s1 + $0x58] sm:$0xff]
    %v32 = vld [vmem:[%s1 + $0x60] sm:$0xff]
    %v33 = vld [vmem:[%s1 + $0x68] sm:$0xff]
    %v34 = vld [vmem:[%s1 + $0x70] sm:$0xff]
    %v35 = vld [vmem:[%s1 + $0x78] sm:$0xff]
    %v36 = vld [vmem:[%s1 + $0x80] sm:$0xff]
    %v37 = vld [vmem:[%s1 + $0x88] sm:$0xff]
    %v38 = vld [vmem:[%s1 + $0x90] sm:$0xff]
    %v39 = vld [vmem:[%s1 + $0x98] sm:$0xff]
    %v40 = vld [vmem:[%s1 + $0xa0] sm:$0xff]
    %v41 = vld [vmem:[%s1 + $0xa8] sm:$0xff]
    %v42 = vld [vmem:[%s1 + $0xb0] sm:$0xff]
    %v43 = vld [vmem:[%s1 + $0xb8] sm:$0xff]
    %v44 = vld [vmem:[%s1 + $0xc0] sm:$0xff]
    %v45 = vld [vmem:[%s1 + $0xc8] sm:$0xff]
    %v46 = vld [vmem:[%s1 + $0xd0] sm:$0xff]
    %v47 = vld [vmem:[%s1 + $0xd8] sm:$0xff]
    %v48 = vld [vmem:[%s1 + $0xe0] sm:$0xff]
    %v49 = vld [vmem:[%s1 + $0xe8] sm:$0xff]
    %v50 = vld [vmem:[%s1 + $0xf0] sm:$0xff]
    %v51 = vld [vmem:[%s1 + $0xf8] sm:$0xff]
    %v52 = vld [vmem:[%s1 + $0x100] sm:$0xff]
    %v53 = vld [vmem:[%s1 + $0x108] sm:$0xff]
    %v54 = vld [vmem:[%s1 + $0x110] sm:$0xff]
    %v55 = vlaneseq
    %v56 = vshrl.u32 %v55, 7
    %v57 = vsub.s32 0, %v56
    %v58 = vrot.slane %v54, %v57
    %vm59 = vcmask 130048
    %v61 = vsel %vm59, %v12, 0
    %v64 = vsel %vm59, %v13, 0
    %v67 = vsel %vm59, %v14, 0
    %v70 = vsel %vm59, %v15, 0
    %v73 = vsel %vm59, %v16, 0
    %v76 = vsel %vm59, %v17, 0
    %v79 = vsel %vm59, %v18, 0
    %v82 = vsel %vm59, %v19, 0
    %84 = vmatprep.subr.mxu0 0.0
    %85 = vmatpush1.msra.mxu0 0.0
    %86 = vmatprep.subr.mxu0 0.0
    %87 = vmatpush1.msra.mxu0 0.0
    %88 = vmatprep.subr.mxu0 0.0
    %89 = vmatpush1.msra.mxu0 0.0
    %90 = vmatprep.subr.mxu0 0.0
    %91 = vmatpush1.msra.mxu0 0.0
    %92 = vmatprep.subr.mxu0 0.0
    %93 = vmatpush1.msra.mxu0 0.0
    %94 = vmatprep.subr.mxu0 0.0
    %95 = vmatpush1.msra.mxu0 0.0
    %96 = vmatprep.subr.mxu0 0.0
    %97 = vmatpush1.msra.mxu0 0.0
    %98 = vmatprep.subr.mxu0 0.0
    %99 = vmatpush1.msra.mxu0 0.0
    %100 = vmatprep.subr.mxu0 0.0
    %101 = vmatpush1.msra.mxu0 0.0
    %102 = vmatprep.subr.mxu0 0.0
    %103 = vmatpush1.msra.mxu0 0.0
    %104 = vmatprep.subr.mxu0 0.0
    %105 = vmatpush1.msra.mxu0 0.0
    %106 = vmatprep.subr.mxu0 0.0
    %107 = vmatpush1.msra.mxu0 0.0
    %108 = vmatprep.subr.mxu0 0.0
    %109 = vmatpush1.msra.mxu0 0.0
    %110 = vmatprep.subr.mxu0 0.0
    %111 = vmatpush1.msra.mxu0 0.0
    %112 = vmatprep.subr.mxu0 0.0
    %113 = vmatpush1.msra.mxu0 %v21
    %114 = vmatprep.subr.mxu0 0.0
    %115 = vmatpush1.msra.mxu0 %v20
    %116 = vmatprep.subr.mxu0 0.0
    %117 = vmatpush2.msra.mxu0 0.0
    %118 = vmatprep.subr.mxu0 0.0
    %119 = vmatpush2.msra.mxu0 0.0
    %120 = vmatprep.subr.mxu0 0.0
    %121 = vmatpush2.msra.mxu0 0.0
    %122 = vmatprep.subr.mxu0 0.0
    %123 = vmatpush2.msra.mxu0 0.0
    %124 = vmatprep.subr.mxu0 0.0
    %125 = vmatpush2.msra.mxu0 0.0
    %126 = vmatprep.subr.mxu0 0.0
    %127 = vmatpush2.msra.mxu0 0.0
    %128 = vmatprep.subr.mxu0 0.0
    %129 = vmatpush2.msra.mxu0 0.0
    %130 = vmatprep.subr.mxu0 0.0
    %131 = vmatpush2.msra.mxu0 0.0
    %132 = vmatprep.subr.mxu0 0.0
    %133 = vmatpush2.msra.mxu0 0.0
    %134 = vmatprep.subr.mxu0 0.0
    %135 = vmatpush2.msra.mxu0 0.0
    %136 = vmatprep.subr.mxu0 0.0
    %137 = vmatpush2.msra.mxu0 0.0
    %138 = vmatprep.subr.mxu0 0.0
    %139 = vmatpush2.msra.mxu0 0.0
    %140 = vmatprep.subr.mxu0 0.0
    %141 = vmatpush2.msra.mxu0 0.0
    %142 = vmatprep.subr.mxu0 0.0
    %143 = vmatpush2.msra.mxu0 0.0
    %144 = vmatprep.subr.mxu0 0.0
    %145 = vmatpush2.msra.mxu0 0.0
    %146 = vmatprep.subr.mxu0 0.0
    %147 = vmatpush2.msra.mxu0 0.0
    %148 = vmatprep.mubr.f32.mxu0 0.0
    %149 = vmatmul.mubr.f32.gmra.mxu0 %v61
    %v150 = vpop.f32.mrf.mxu0
    %v151 = vadd.f32 %v58, %v150
    %v152 = vpop.f32.mrf.mxu0
    %153 = vmatprep.mubr.f32.mxu0 0.0
    %154 = vmatmul.mubr.f32.gmra.mxu0 %v64
    %v155 = vpop.f32.mrf.mxu0
    %v156 = vadd.f32 %v58, %v155
    %v157 = vpop.f32.mrf.mxu0
    %158 = vmatprep.mubr.f32.mxu0 0.0
    %159 = vmatmul.mubr.f32.gmra.mxu0 %v67
    %v160 = vpop.f32.mrf.mxu0
    %v161 = vadd.f32 %v58, %v160
    %v162 = vpop.f32.mrf.mxu0
    %163 = vmatprep.mubr.f32.mxu0 0.0
    %164 = vmatmul.mubr.f32.gmra.mxu0 %v70
    %v165 = vpop.f32.mrf.mxu0
    %v166 = vadd.f32 %v58, %v165
    %v167 = vpop.f32.mrf.mxu0
    %168 = vmatprep.mubr.f32.mxu0 0.0
    %169 = vmatmul.mubr.f32.gmra.mxu0 %v73
    %v170 = vpop.f32.mrf.mxu0
    %v171 = vadd.f32 %v58, %v170
    %v172 = vpop.f32.mrf.mxu0
    %173 = vmatprep.mubr.f32.mxu0 0.0
    %174 = vmatmul.mubr.f32.gmra.mxu0 %v76
    %v175 = vpop.f32.mrf.mxu0
    %v176 = vadd.f32 %v58, %v175
    %v177 = vpop.f32.mrf.mxu0
    %178 = vmatprep.mubr.f32.mxu0 0.0
    %179 = vmatmul.mubr.f32.gmra.mxu0 %v79
    %v180 = vpop.f32.mrf.mxu0
    %v181 = vadd.f32 %v58, %v180
    %v182 = vpop.f32.mrf.mxu0
    %183 = vmatprep.mubr.f32.mxu0 0.0
    %184 = vmatmul.mubr.f32.gmra.mxu0 %v82
    %v185 = vpop.f32.mrf.mxu0
    %v186 = vadd.f32 %v58, %v185
    %v187 = vpop.f32.mrf.mxu0
    %188 = vdwg.mxu0
    %v189 = vtanh.pop %v151
    %v190 = vtanh.pop %v156
    %v191 = vtanh.pop %v161
    %v192 = vtanh.pop %v166
    %v193 = vtanh.pop %v171
    %v194 = vtanh.pop %v176
    %v195 = vtanh.pop %v181
    %v196 = vtanh.pop %v186
    %v197 = vlaneseq
    %v198 = vshrl.u32 %v197, 7
    %v199 = vsub.s32 1, %v198
    %v200 = vrot.slane %v54, %v199
    %vm201 = vcmask 523264
    %v203 = vsel %vm201, %v189, 0
    %v206 = vsel %vm201, %v190, 0
    %v209 = vsel %vm201, %v191, 0
    %v212 = vsel %vm201, %v192, 0
    %v215 = vsel %vm201, %v193, 0
    %v218 = vsel %vm201, %v194, 0
    %v221 = vsel %vm201, %v195, 0
    %v224 = vsel %vm201, %v196, 0
    %226 = vmatprep.subr.mxu0 0.0
    %227 = vmatpush1.msra.mxu0 0.0
    %228 = vmatprep.subr.mxu0 0.0
    %229 = vmatpush1.msra.mxu0 0.0
    %230 = vmatprep.subr.mxu0 0.0
    %231 = vmatpush1.msra.mxu0 0.0
    %232 = vmatprep.subr.mxu0 0.0
    %233 = vmatpush1.msra.mxu0 0.0
    %234 = vmatprep.subr.mxu0 0.0
    %235 = vmatpush1.msra.mxu0 0.0
    %236 = vmatprep.subr.mxu0 0.0
    %237 = vmatpush1.msra.mxu0 0.0
    %238 = vmatprep.subr.mxu0 0.0
    %239 = vmatpush1.msra.mxu0 0.0
    %240 = vmatprep.subr.mxu0 0.0
    %241 = vmatpush1.msra.mxu0 0.0
    %242 = vmatprep.subr.mxu0 0.0
    %243 = vmatpush1.msra.mxu0 %v29
    %244 = vmatprep.subr.mxu0 0.0
    %245 = vmatpush1.msra.mxu0 %v28
    %246 = vmatprep.subr.mxu0 0.0
    %247 = vmatpush1.msra.mxu0 %v27
    %248 = vmatprep.subr.mxu0 0.0
    %249 = vmatpush1.msra.mxu0 %v26
    %250 = vmatprep.subr.mxu0 0.0
    %251 = vmatpush1.msra.mxu0 %v25
    %252 = vmatprep.subr.mxu0 0.0
    %253 = vmatpush1.msra.mxu0 %v24
    %254 = vmatprep.subr.mxu0 0.0
    %255 = vmatpush1.msra.mxu0 %v23
    %256 = vmatprep.subr.mxu0 0.0
    %257 = vmatpush1.msra.mxu0 %v22
    %258 = vmatprep.subr.mxu0 0.0
    %259 = vmatpush2.msra.mxu0 0.0
    %260 = vmatprep.subr.mxu0 0.0
    %261 = vmatpush2.msra.mxu0 0.0
    %262 = vmatprep.subr.mxu0 0.0
    %263 = vmatpush2.msra.mxu0 0.0
    %264 = vmatprep.subr.mxu0 0.0
    %265 = vmatpush2.msra.mxu0 0.0
    %266 = vmatprep.subr.mxu0 0.0
    %267 = vmatpush2.msra.mxu0 0.0
    %268 = vmatprep.subr.mxu0 0.0
    %269 = vmatpush2.msra.mxu0 0.0
    %270 = vmatprep.subr.mxu0 0.0
    %271 = vmatpush2.msra.mxu0 0.0
    %272 = vmatprep.subr.mxu0 0.0
    %273 = vmatpush2.msra.mxu0 0.0
    %274 = vmatprep.subr.mxu0 0.0
    %275 = vmatpush2.msra.mxu0 0.0
    %276 = vmatprep.subr.mxu0 0.0
    %277 = vmatpush2.msra.mxu0 0.0
    %278 = vmatprep.subr.mxu0 0.0
    %279 = vmatpush2.msra.mxu0 0.0
    %280 = vmatprep.subr.mxu0 0.0
    %281 = vmatpush2.msra.mxu0 0.0
    %282 = vmatprep.subr.mxu0 0.0
    %283 = vmatpush2.msra.mxu0 0.0
    %284 = vmatprep.subr.mxu0 0.0
    %285 = vmatpush2.msra.mxu0 0.0
    %286 = vmatprep.subr.mxu0 0.0
    %287 = vmatpush2.msra.mxu0 0.0
    %288 = vmatprep.subr.mxu0 0.0
    %289 = vmatpush2.msra.mxu0 0.0
    %290 = vmatprep.mubr.f32.mxu0 0.0
    %291 = vmatmul.mubr.f32.gmra.mxu0 %v203
    %v292 = vpop.f32.mrf.mxu0
    %v293 = vadd.f32 %v200, %v292
    %v294 = vpop.f32.mrf.mxu0
    %295 = vmatprep.mubr.f32.mxu0 0.0
    %296 = vmatmul.mubr.f32.gmra.mxu0 %v206
    %v297 = vpop.f32.mrf.mxu0
    %v298 = vadd.f32 %v200, %v297
    %v299 = vpop.f32.mrf.mxu0
    %300 = vmatprep.mubr.f32.mxu0 0.0
    %301 = vmatmul.mubr.f32.gmra.mxu0 %v209
    %v302 = vpop.f32.mrf.mxu0
    %v303 = vadd.f32 %v200, %v302
    %v304 = vpop.f32.mrf.mxu0
    %305 = vmatprep.mubr.f32.mxu0 0.0
    %306 = vmatmul.mubr.f32.gmra.mxu0 %v212
    %v307 = vpop.f32.mrf.mxu0
    %v308 = vadd.f32 %v200, %v307
    %v309 = vpop.f32.mrf.mxu0
    %310 = vmatprep.mubr.f32.mxu0 0.0
    %311 = vmatmul.mubr.f32.gmra.mxu0 %v215
    %v312 = vpop.f32.mrf.mxu0
    %v313 = vadd.f32 %v200, %v312
    %v314 = vpop.f32.mrf.mxu0
    %315 = vmatprep.mubr.f32.mxu0 0.0
    %316 = vmatmul.mubr.f32.gmra.mxu0 %v218
    %v317 = vpop.f32.mrf.mxu0
    %v318 = vadd.f32 %v200, %v317
    %v319 = vpop.f32.mrf.mxu0
    %320 = vmatprep.mubr.f32.mxu0 0.0
    %321 = vmatmul.mubr.f32.gmra.mxu0 %v221
    %v322 = vpop.f32.mrf.mxu0
    %v323 = vadd.f32 %v200, %v322
    %v324 = vpop.f32.mrf.mxu0
    %325 = vmatprep.mubr.f32.mxu0 0.0
    %326 = vmatmul.mubr.f32.gmra.mxu0 %v224
    %v327 = vpop.f32.mrf.mxu0
    %v328 = vadd.f32 %v200, %v327
    %v329 = vpop.f32.mrf.mxu0
    %330 = vdwg.mxu0
    %v331 = vtanh.pop %v293
    %v332 = vtanh.pop %v298
    %v333 = vtanh.pop %v303
    %v334 = vtanh.pop %v308
    %v335 = vtanh.pop %v313
    %v336 = vtanh.pop %v318
    %v337 = vtanh.pop %v323
    %v338 = vtanh.pop %v328
    %v339 = vsel %vm201, %v331, 0.0
    %v340 = vsel %vm201, %v332, 0.0
    %v341 = vadd.f32 %v339, %v340
    %v342 = vsel %vm201, %v333, 0.0
    %v343 = vadd.f32 %v341, %v342
    %v344 = vsel %vm201, %v334, 0.0
    %v345 = vadd.f32 %v343, %v344
    %v346 = vsel %vm201, %v335, 0.0
    %v347 = vadd.f32 %v345, %v346
    %v348 = vsel %vm201, %v336, 0.0
    %v349 = vadd.f32 %v347, %v348
    %v350 = vsel %vm201, %v337, 0.0
    %v351 = vadd.f32 %v349, %v350
    %v352 = vsel %vm201, %v338, 0.0
    %v353 = vadd.f32 %v351, %v352
    %v354 = vrot.slane %v353, 4
    %v355 = vadd.f32 %v353, %v354
    %v356 = vrot.slane %v355, 2
    %v357 = vadd.f32 %v355, %v356
    %v358 = vrot.slane %v357, 1
    %v359 = vadd.f32 %v357, %v358
    %v360 = vmul.f32 %v54, 64.0
    %v362 = vrot.slane %v360, 2
    %v365 = vsel %vm201, %v359, 0
    %367 = vmatprep.subr.mxu0 0.0
    %368 = vmatpush1.msra.mxu0 0.0
    %369 = vmatprep.subr.mxu0 0.0
    %370 = vmatpush1.msra.mxu0 0.0
    %371 = vmatprep.subr.mxu0 0.0
    %372 = vmatpush1.msra.mxu0 0.0
    %373 = vmatprep.subr.mxu0 0.0
    %374 = vmatpush1.msra.mxu0 0.0
    %375 = vmatprep.subr.mxu0 0.0
    %376 = vmatpush1.msra.mxu0 0.0
    %377 = vmatprep.subr.mxu0 0.0
    %378 = vmatpush1.msra.mxu0 0.0
    %379 = vmatprep.subr.mxu0 0.0
    %380 = vmatpush1.msra.mxu0 0.0
    %381 = vmatprep.subr.mxu0 0.0
    %382 = vmatpush1.msra.mxu0 0.0
    %383 = vmatprep.subr.mxu0 0.0
    %384 = vmatpush1.msra.mxu0 %v37
    %385 = vmatprep.subr.mxu0 0.0
    %386 = vmatpush1.msra.mxu0 %v36
    %387 = vmatprep.subr.mxu0 0.0
    %388 = vmatpush1.msra.mxu0 %v35
    %389 = vmatprep.subr.mxu0 0.0
    %390 = vmatpush1.msra.mxu0 %v34
    %391 = vmatprep.subr.mxu0 0.0
    %392 = vmatpush1.msra.mxu0 %v33
    %393 = vmatprep.subr.mxu0 0.0
    %394 = vmatpush1.msra.mxu0 %v32
    %395 = vmatprep.subr.mxu0 0.0
    %396 = vmatpush1.msra.mxu0 %v31
    %397 = vmatprep.subr.mxu0 0.0
    %398 = vmatpush1.msra.mxu0 %v30
    %399 = vmatprep.subr.mxu0 0.0
    %400 = vmatpush2.msra.mxu0 0.0
    %401 = vmatprep.subr.mxu0 0.0
    %402 = vmatpush2.msra.mxu0 0.0
    %403 = vmatprep.subr.mxu0 0.0
    %404 = vmatpush2.msra.mxu0 0.0
    %405 = vmatprep.subr.mxu0 0.0
    %406 = vmatpush2.msra.mxu0 0.0
    %407 = vmatprep.subr.mxu0 0.0
    %408 = vmatpush2.msra.mxu0 0.0
    %409 = vmatprep.subr.mxu0 0.0
    %410 = vmatpush2.msra.mxu0 0.0
    %411 = vmatprep.subr.mxu0 0.0
    %412 = vmatpush2.msra.mxu0 0.0
    %413 = vmatprep.subr.mxu0 0.0
    %414 = vmatpush2.msra.mxu0 0.0
    %415 = vmatprep.subr.mxu0 0.0
    %416 = vmatpush2.msra.mxu0 0.0
    %417 = vmatprep.subr.mxu0 0.0
    %418 = vmatpush2.msra.mxu0 0.0
    %419 = vmatprep.subr.mxu0 0.0
    %420 = vmatpush2.msra.mxu0 0.0
    %421 = vmatprep.subr.mxu0 0.0
    %422 = vmatpush2.msra.mxu0 0.0
    %423 = vmatprep.subr.mxu0 0.0
    %424 = vmatpush2.msra.mxu0 0.0
    %425 = vmatprep.subr.mxu0 0.0
    %426 = vmatpush2.msra.mxu0 0.0
    %427 = vmatprep.subr.mxu0 0.0
    %428 = vmatpush2.msra.mxu0 0.0
    %429 = vmatprep.subr.mxu0 0.0
    %430 = vmatpush2.msra.mxu0 0.0
    %431 = vmatprep.mubr.f32.mxu0 0.0
    %432 = vmatmul.mubr.f32.gmra.mxu0 %v365
    %v433 = vpop.f32.mrf.mxu0
    %v434 = vadd.f32 %v362, %v433
    %v435 = vpop.f32.mrf.mxu0
    %436 = vdwg.mxu0
    %v438 = vrot.slane %v54, 3
    %v440 = vadd.f32 %v434, %v438
    %v441 = vtanh.pop %v440
    %v442 = vrot.slane %v54, 4
    %v445 = vsel %vm201, %v441, 0
    %447 = vmatprep.subr.mxu0 0.0
    %448 = vmatpush1.msra.mxu0 0.0
    %449 = vmatprep.subr.mxu0 0.0
    %450 = vmatpush1.msra.mxu0 0.0
    %451 = vmatprep.subr.mxu0 0.0
    %452 = vmatpush1.msra.mxu0 0.0
    %453 = vmatprep.subr.mxu0 0.0
    %454 = vmatpush1.msra.mxu0 0.0
    %455 = vmatprep.subr.mxu0 0.0
    %456 = vmatpush1.msra.mxu0 0.0
    %457 = vmatprep.subr.mxu0 0.0
    %458 = vmatpush1.msra.mxu0 0.0
    %459 = vmatprep.subr.mxu0 0.0
    %460 = vmatpush1.msra.mxu0 0.0
    %461 = vmatprep.subr.mxu0 0.0
    %462 = vmatpush1.msra.mxu0 0.0
    %463 = vmatprep.subr.mxu0 0.0
    %464 = vmatpush1.msra.mxu0 %v45
    %465 = vmatprep.subr.mxu0 0.0
    %466 = vmatpush1.msra.mxu0 %v44
    %467 = vmatprep.subr.mxu0 0.0
    %468 = vmatpush1.msra.mxu0 %v43
    %469 = vmatprep.subr.mxu0 0.0
    %470 = vmatpush1.msra.mxu0 %v42
    %471 = vmatprep.subr.mxu0 0.0
    %472 = vmatpush1.msra.mxu0 %v41
    %473 = vmatprep.subr.mxu0 0.0
    %474 = vmatpush1.msra.mxu0 %v40
    %475 = vmatprep.subr.mxu0 0.0
    %476 = vmatpush1.msra.mxu0 %v39
    %477 = vmatprep.subr.mxu0 0.0
    %478 = vmatpush1.msra.mxu0 %v38
    %479 = vmatprep.subr.mxu0 0.0
    %480 = vmatpush2.msra.mxu0 0.0
    %481 = vmatprep.subr.mxu0 0.0
    %482 = vmatpush2.msra.mxu0 0.0
    %483 = vmatprep.subr.mxu0 0.0
    %484 = vmatpush2.msra.mxu0 0.0
    %485 = vmatprep.subr.mxu0 0.0
    %486 = vmatpush2.msra.mxu0 0.0
    %487 = vmatprep.subr.mxu0 0.0
    %488 = vmatpush2.msra.mxu0 0.0
    %489 = vmatprep.subr.mxu0 0.0
    %490 = vmatpush2.msra.mxu0 0.0
    %491 = vmatprep.subr.mxu0 0.0
    %492 = vmatpush2.msra.mxu0 0.0
    %493 = vmatprep.subr.mxu0 0.0
    %494 = vmatpush2.msra.mxu0 0.0
    %495 = vmatprep.subr.mxu0 0.0
    %496 = vmatpush2.msra.mxu0 0.0
    %497 = vmatprep.subr.mxu0 0.0
    %498 = vmatpush2.msra.mxu0 0.0
    %499 = vmatprep.subr.mxu0 0.0
    %500 = vmatpush2.msra.mxu0 0.0
    %501 = vmatprep.subr.mxu0 0.0
    %502 = vmatpush2.msra.mxu0 0.0
    %503 = vmatprep.subr.mxu0 0.0
    %504 = vmatpush2.msra.mxu0 0.0
    %505 = vmatprep.subr.mxu0 0.0
    %506 = vmatpush2.msra.mxu0 0.0
    %507 = vmatprep.subr.mxu0 0.0
    %508 = vmatpush2.msra.mxu0 0.0
    %509 = vmatprep.subr.mxu0 0.0
    %510 = vmatpush2.msra.mxu0 0.0
    %511 = vmatprep.mubr.f32.mxu0 0.0
    %512 = vmatmul.mubr.f32.gmra.mxu0 %v445
    %v513 = vpop.f32.mrf.mxu0
    %v514 = vadd.f32 %v442, %v513
    %v515 = vpop.f32.mrf.mxu0
    %516 = vdwg.mxu0
    %v517 = vtanh.pop %v514
    %v518 = vrot.slane %v54, 5
    %v521 = vsel %vm201, %v517, 0
    %523 = vmatprep.subr.mxu0 0.0
    %524 = vmatpush1.msra.mxu0 0.0
    %525 = vmatprep.subr.mxu0 0.0
    %526 = vmatpush1.msra.mxu0 0.0
    %527 = vmatprep.subr.mxu0 0.0
    %528 = vmatpush1.msra.mxu0 0.0
    %529 = vmatprep.subr.mxu0 0.0
    %530 = vmatpush1.msra.mxu0 0.0
    %531 = vmatprep.subr.mxu0 0.0
    %532 = vmatpush1.msra.mxu0 0.0
    %533 = vmatprep.subr.mxu0 0.0
    %534 = vmatpush1.msra.mxu0 0.0
    %535 = vmatprep.subr.mxu0 0.0
    %536 = vmatpush1.msra.mxu0 0.0
    %537 = vmatprep.subr.mxu0 0.0
    %538 = vmatpush1.msra.mxu0 0.0
    %539 = vmatprep.subr.mxu0 0.0
    %540 = vmatpush1.msra.mxu0 %v53
    %541 = vmatprep.subr.mxu0 0.0
    %542 = vmatpush1.msra.mxu0 %v52
    %543 = vmatprep.subr.mxu0 0.0
    %544 = vmatpush1.msra.mxu0 %v51
    %545 = vmatprep.subr.mxu0 0.0
    %546 = vmatpush1.msra.mxu0 %v50
    %547 = vmatprep.subr.mxu0 0.0
    %548 = vmatpush1.msra.mxu0 %v49
    %549 = vmatprep.subr.mxu0 0.0
    %550 = vmatpush1.msra.mxu0 %v48
    %551 = vmatprep.subr.mxu0 0.0
    %552 = vmatpush1.msra.mxu0 %v47
    %553 = vmatprep.subr.mxu0 0.0
    %554 = vmatpush1.msra.mxu0 %v46
    %555 = vmatprep.subr.mxu0 0.0
    %556 = vmatpush2.msra.mxu0 0.0
    %557 = vmatprep.subr.mxu0 0.0
    %558 = vmatpush2.msra.mxu0 0.0
    %559 = vmatprep.subr.mxu0 0.0
    %560 = vmatpush2.msra.mxu0 0.0
    %561 = vmatprep.subr.mxu0 0.0
    %562 = vmatpush2.msra.mxu0 0.0
    %563 = vmatprep.subr.mxu0 0.0
    %564 = vmatpush2.msra.mxu0 0.0
    %565 = vmatprep.subr.mxu0 0.0
    %566 = vmatpush2.msra.mxu0 0.0
    %567 = vmatprep.subr.mxu0 0.0
    %568 = vmatpush2.msra.mxu0 0.0
    %569 = vmatprep.subr.mxu0 0.0
    %570 = vmatpush2.msra.mxu0 0.0
    %571 = vmatprep.subr.mxu0 0.0
    %572 = vmatpush2.msra.mxu0 0.0
    %573 = vmatprep.subr.mxu0 0.0
    %574 = vmatpush2.msra.mxu0 0.0
    %575 = vmatprep.subr.mxu0 0.0
    %576 = vmatpush2.msra.mxu0 0.0
    %577 = vmatprep.subr.mxu0 0.0
    %578 = vmatpush2.msra.mxu0 0.0
    %579 = vmatprep.subr.mxu0 0.0
    %580 = vmatpush2.msra.mxu0 0.0
    %581 = vmatprep.subr.mxu0 0.0
    %582 = vmatpush2.msra.mxu0 0.0
    %583 = vmatprep.subr.mxu0 0.0
    %584 = vmatpush2.msra.mxu0 0.0
    %585 = vmatprep.subr.mxu0 0.0
    %586 = vmatpush2.msra.mxu0 0.0
    %587 = vmatprep.mubr.f32.mxu0 0.0
    %588 = vmatmul.mubr.f32.gmra.mxu0 %v521
    %v589 = vpop.f32.mrf.mxu0
    %v590 = vadd.f32 %v518, %v589
    %v591 = vpop.f32.mrf.mxu0
    %592 = vdwg.mxu0
    %vm593 = vcmask 516096
    %594 = vst.msk [vmem:[#allocation2] sm:$0x1] %vm593, %v590
    // Predicated region
    $region10: #{tpu_custom_call.1} parent=1 // pred_check
      _
    $region11: #{tpu_custom_call.1} parent=1 // pred_check_branch
      %596 = sbr.rel (0) target = $region13
    $region12: #{tpu_custom_call.1} parent=1 // pred_region
      %s598 = ssub.s32 16, 16
      %599 = vsyncadd [#allocation3], %s598
      %s601 = sshll.u32 [#allocation2], 4
      %s602 = int_to_ptr.vmem [resolvable:$true] %s601
      %604 = dma.vmem_to_hbm [thread:$0]  %s602, 16, %s2, [#allocation3]
    $region13: #{tpu_custom_call.1} parent=1 // pred_fallthru
      _
    // Predicated region
    $region14: #{tpu_custom_call.1} parent=1 // pred_check
      _
    $region15: #{tpu_custom_call.1} parent=1 // pred_check_branch
      %606 = sbr.rel (0) target = $region17
    $region16: #{tpu_custom_call.1} parent=1 // pred_region
      %607 = dma.done [#allocation3], 16
    $region17: #{tpu_custom_call.1} parent=1 // pred_fallthru
      _
    %608 = vsyncpa [#allocation3], 1

</llo_original>
